<compile_context>
chip_gen: v6e
topology: v6e:2x2x1
jax: 0.10.0
libtpu: 0.0.40
codegen_flags: <defaults>
</compile_context>

<pallas_src>
import jax
import jax.numpy as jnp
from jax.experimental import pallas as pl
from jax.experimental.pallas import tpu as pltpu


def _merge_kernel(w_ref, base_ref, lora_ref, out_ref, acc_ref):
    """One grid step == one (layer, B-tile, A-tile, head).

    w_ref    : (L*H,)         flattened softmaxed head weights, SMEM (scalar prefetch)
    base_ref : (1, tb, ta)    base-weight tile (resident across the head axis)
    lora_ref : (1, 1, tb, ta) one head's tile for the same (layer, B, A) window
    out_ref  : (1, tb, ta)    output tile (resident across the head axis)
    acc_ref  : (tb, ta)       f32 accumulator scratch
    """
    l = pl.program_id(0)
    h = pl.program_id(3)
    num_heads = pl.num_programs(3)

    @pl.when(h == 0)
    def _():
        acc_ref[...] = base_ref[0].astype(jnp.float32)

    # SMEM scalar * VMEM tile: scalar-times-vector on the VPU.
    w = w_ref[l * num_heads + h]
    acc_ref[...] += w * lora_ref[0, 0].astype(jnp.float32)

    @pl.when(h == num_heads - 1)
    def _():
        out_ref[0] = acc_ref[...].astype(out_ref.dtype)


def _divisor_tiles(dim, align):
    """Divisors of `dim` that are multiples of `align`, descending.

    Falls back to multiples of 8, then to the full extent (always a legal block)."""
    cands = [t for t in range(align, dim + 1, align) if dim % t == 0]
    if not cands and align > 8:
        cands = [t for t in range(8, dim + 1, 8) if dim % t == 0]
    if not cands:
        cands = [dim]
    return sorted(set(cands), reverse=True)


def _choose_tiles(B, A, dtype_bytes, budget_bytes):
    """Pick (tb, ta) so the double-buffered working set fits `budget_bytes`.

    Per output element: base + lora + out double-buffered (2*3*dtype) plus the f32
    accumulator scratch (4 B) — independent of the number of heads."""
    per_elem = 6 * dtype_bytes + 4
    sub_align = 8 * max(1, 4 // dtype_bytes)   # 8 for f32, 16 for bf16, 32 for int8/fp8
    ta_cands = _divisor_tiles(A, 128)
    tb_cands = _divisor_tiles(B, sub_align)

    # Keep ta (lane / contiguous-DMA dim) as large as possible; shrink tb to fit.
    for ta in ta_cands:
        for tb in tb_cands:
            if tb * ta * per_elem <= budget_bytes:
                return tb, ta
    # Nothing fits the soft budget (non-divisible shapes): smallest legal tile;
    # the caller sizes vmem_limit from the actual working set.
    return tb_cands[-1], ta_cands[-1]


def _vmem_info():
    """(soft working-set budget, physical VMEM bytes) for the current generation."""
    phys = 128 * 1024 * 1024
    try:
        phys = int(getattr(pltpu.get_tpu_info(), "vmem_capacity_bytes", phys))
    except Exception:
        pass
    # ~5/8 of physical VMEM for the double-buffered working set:
    #   v5e/v6e (128 MiB) -> ~80 MiB,  v7x (64 MiB) -> ~40 MiB.
    return (phys * 5) // 8, phys


def layer_merger_forward(alpha, base_weights, lora_heads, *, learnable=True,
                         vmem_budget_bytes=None):
    """merged[l] = base[l] + sum_i softmax(alpha[l])[i] * lora_heads[l, i]"""
    L, H, B, A = lora_heads.shape
    assert base_weights.shape == (L, B, A)
    assert alpha.shape == (L, H)

    # Softmax over heads hoisted out of the kernel (only L*H elements); flattened to
    # 1-D so SMEM padding stays tiny (2-D would pad the last axis to 128 words).
    if learnable:
        w = jax.nn.softmax(alpha.astype(jnp.float32), axis=-1)
    else:
        w = alpha.astype(jnp.float32)
    w = w.reshape(L * H)

    dtype_bytes = jnp.dtype(base_weights.dtype).itemsize
    budget, phys_vmem = _vmem_info()
    if vmem_budget_bytes is not None:
        budget = int(vmem_budget_bytes)

    tb, ta = _choose_tiles(B, A, dtype_bytes, budget)
    grid = (L, B // tb, A // ta, H)   # head reduction last ("arbitrary")

    # Actual double-buffered working set for this tile choice; never declare a
    # vmem_limit smaller than it, cap at (physical - reserve) on this generation.
    ws_bytes = (6 * dtype_bytes + 4) * tb * ta
    vmem_limit = min(max(ws_bytes + (8 << 20), 32 << 20),
                     max(phys_vmem - (4 << 20), 32 << 20))
    vmem_limit = max(vmem_limit, ws_bytes + (1 << 20))

    cost = pl.CostEstimate(
        flops=2 * H * L * B * A,
        transcendentals=0,
        bytes_accessed=(H + 2) * L * B * A * dtype_bytes,
    )

    return pl.pallas_call(
        _merge_kernel,
        out_shape=jax.ShapeDtypeStruct((L, B, A), base_weights.dtype),
        grid_spec=pltpu.PrefetchScalarGridSpec(
            num_scalar_prefetch=1,  # softmaxed weights -> SMEM scalars
            grid=grid,
            in_specs=[
                # base tile: same block index across the head axis -> stays resident
                pl.BlockSpec((1, tb, ta), lambda l, bi, ai, h, w_s: (l, bi, ai)),
                # one head's tile per grid step
                pl.BlockSpec((1, 1, tb, ta), lambda l, bi, ai, h, w_s: (l, h, bi, ai)),
            ],
            out_specs=pl.BlockSpec((1, tb, ta), lambda l, bi, ai, h, w_s: (l, bi, ai)),
            scratch_shapes=[pltpu.VMEM((tb, ta), jnp.float32)],
        ),
        compiler_params=pltpu.CompilerParams(
            dimension_semantics=("parallel", "parallel", "parallel", "arbitrary"),
            vmem_limit_bytes=int(vmem_limit),
        ),
        cost_estimate=cost,
    )(w, base_weights, lora_heads)


def _reference(alpha, base_weights, lora_heads, learnable=True):
    w = jax.nn.softmax(alpha, axis=-1) if learnable else alpha
    return base_weights + jnp.einsum("lh,lhba->lba", w, lora_heads)


if __name__ == "__main__":
    # Small shapes consistent with the module's forward.
    num_layers, num_heads, B_dim, A_dim = 3, 4, 16, 128

    key = jax.random.PRNGKey(0)
    k_base, k_lora, k_base2, k_lora2 = jax.random.split(key, 4)

    base_weights = jax.random.normal(k_base, (num_layers, B_dim, A_dim), dtype=jnp.float32)
    lora_heads = jax.random.normal(
        k_lora, (num_layers, num_heads, B_dim, A_dim), dtype=jnp.float32
    )
    # deterministic parameter init, exactly as in __init__: ones / num_heads
    alpha = jnp.ones((num_layers, num_heads), dtype=jnp.float32) / num_heads

    out = layer_merger_forward(alpha, base_weights, lora_heads)
    out = jax.block_until_ready(out)
    ref = _reference(alpha, base_weights, lora_heads)
    assert out.shape == (num_layers, B_dim, A_dim)
    assert jnp.allclose(out, ref, atol=1e-5, rtol=1e-5)

    # Second check with a tiny VMEM budget to force a multi-tile (B, A) grid and
    # exercise the head-axis accumulator across tile boundaries.
    L2, H2, B2, A2 = 2, 3, 256, 512
    base2 = jax.random.normal(k_base2, (L2, B2, A2), dtype=jnp.float32)
    lora2 = jax.random.normal(k_lora2, (L2, H2, B2, A2), dtype=jnp.float32)
    alpha2 = jax.random.normal(key, (L2, H2), dtype=jnp.float32)

    out2 = layer_merger_forward(alpha2, base2, lora2, vmem_budget_bytes=1 << 20)
    out2 = jax.block_until_ready(out2)
    ref2 = _reference(alpha2, base2, lora2)
    assert jnp.allclose(out2, ref2, atol=1e-4, rtol=1e-4)

    print("KERNEL_OK")
</pallas_src>

<mosaic_0001>
module attributes {stable_mosaic.version = 11 : i64} {
  func.func @_merge_kernel(%arg0: i32, %arg1: i32, %arg2: i32, %arg3: i32, %arg4: memref<12xf32, #tpu.memory_space<smem>>, %arg5: memref<1x16x128xf32, #tpu.memory_space<vmem>>, %arg6: memref<1x1x16x128xf32, #tpu.memory_space<vmem>>, %arg7: memref<1x16x128xf32, #tpu.memory_space<vmem>>, %arg8: memref<16x128xf32, #tpu.memory_space<vmem>>) attributes {dimension_semantics = [#tpu.dimension_semantics<parallel>, #tpu.dimension_semantics<parallel>, #tpu.dimension_semantics<parallel>, #tpu.dimension_semantics<arbitrary>], iteration_bounds = array<i64: 3, 1, 1, 4>, scalar_prefetch = 1 : i64, scratch_operands = 1 : i64, tpu.core_type = #tpu.core_type<tc>, window_params = [{transform_indices = @transform_0, window_bounds = array<i64: 1, 16, 128>}, {transform_indices = @transform_1, window_bounds = array<i64: 1, 1, 16, 128>}, {transform_indices = @transform_2, window_bounds = array<i64: 1, 16, 128>}]} {
    %c0_i32 = arith.constant 0 : i32
    %0 = arith.cmpi eq, %arg3, %c0_i32 : i32
    %1 = arith.extui %0 : i1 to i32
    %c0_i32_0 = arith.constant 0 : i32
    %2 = arith.cmpi ne, %1, %c0_i32_0 : i32
    scf.if %2 {
      %c0_9 = arith.constant 0 : index
      %c0_10 = arith.constant 0 : index
      %c0_11 = arith.constant 0 : index
      %17 = vector.load %arg5[%c0_9, %c0_10, %c0_11] : memref<1x16x128xf32, #tpu.memory_space<vmem>>, vector<1x16x128xf32>
      %18 = vector.shape_cast %17 : vector<1x16x128xf32> to vector<16x128xf32>
      %c0_12 = arith.constant 0 : index
      %c0_13 = arith.constant 0 : index
      %19 = vector.load %arg8[%c0_12, %c0_13] : memref<16x128xf32, #tpu.memory_space<vmem>>, vector<16x128xf32>
      tpu.vector_store %arg8[%c0_12, %c0_13], %18 {strides = array<i32>} : memref<16x128xf32, #tpu.memory_space<vmem>>, vector<16x128xf32>,
    } else {
    }
    %c4_i32 = arith.constant 4 : i32
    %3 = arith.muli %arg0, %c4_i32 : i32
    %4 = arith.addi %3, %arg3 : i32
    %5 = arith.index_cast %4 : i32 to index
    %6 = memref.load %arg4[%5] : memref<12xf32, #tpu.memory_space<smem>>
    %c0 = arith.constant 0 : index
    %c0_1 = arith.constant 0 : index
    %7 = vector.load %arg8[%c0, %c0_1] : memref<16x128xf32, #tpu.memory_space<vmem>>, vector<16x128xf32>
    %c0_2 = arith.constant 0 : index
    %c0_3 = arith.constant 0 : index
    %c0_4 = arith.constant 0 : index
    %c0_5 = arith.constant 0 : index
    %8 = vector.load %arg6[%c0_2, %c0_3, %c0_4, %c0_5] : memref<1x1x16x128xf32, #tpu.memory_space<vmem>>, vector<1x1x16x128xf32>
    %9 = vector.shape_cast %8 : vector<1x1x16x128xf32> to vector<16x128xf32>
    %10 = vector.broadcast %6 : f32 to vector<16x128xf32>
    %11 = arith.mulf %10, %9 : vector<16x128xf32>
    %12 = arith.addf %7, %11 : vector<16x128xf32>
    %c0_6 = arith.constant 0 : index
    %c0_7 = arith.constant 0 : index
    %13 = vector.load %arg8[%c0_6, %c0_7] : memref<16x128xf32, #tpu.memory_space<vmem>>, vector<16x128xf32>
    tpu.vector_store %arg8[%c0_6, %c0_7], %12 {strides = array<i32>} : memref<16x128xf32, #tpu.memory_space<vmem>>, vector<16x128xf32>,
    %c3_i32 = arith.constant 3 : i32
    %14 = arith.cmpi eq, %arg3, %c3_i32 : i32
    %15 = arith.extui %14 : i1 to i32
    %c0_i32_8 = arith.constant 0 : i32
    %16 = arith.cmpi ne, %15, %c0_i32_8 : i32
    scf.if %16 {
      %c0_9 = arith.constant 0 : index
      %c0_10 = arith.constant 0 : index
      %17 = vector.load %arg8[%c0_9, %c0_10] : memref<16x128xf32, #tpu.memory_space<vmem>>, vector<16x128xf32>
      %c0_11 = arith.constant 0 : index
      %c0_12 = arith.constant 0 : index
      %c0_13 = arith.constant 0 : index
      %18 = vector.load %arg7[%c0_11, %c0_12, %c0_13] : memref<1x16x128xf32, #tpu.memory_space<vmem>>, vector<1x16x128xf32>
      %19 = vector.shape_cast %18 : vector<1x16x128xf32> to vector<16x128xf32>
      %20 = vector.shape_cast %17 : vector<16x128xf32> to vector<1x16x128xf32>
      tpu.vector_store %arg7[%c0_11, %c0_12, %c0_13], %20 {strides = array<i32>} : memref<1x16x128xf32, #tpu.memory_space<vmem>>, vector<1x16x128xf32>,
    } else {
    }
    return
  }
  func.func @transform_0(%arg0: i32, %arg1: i32, %arg2: i32, %arg3: i32, %arg4: memref<12xf32, #tpu.memory_space<smem>>) -> (i32, i32, i32) {
    %c0_i32 = arith.constant 0 : i32
    return %arg0, %arg1, %arg2 : i32, i32, i32
  }
  func.func @transform_1(%arg0: i32, %arg1: i32, %arg2: i32, %arg3: i32, %arg4: memref<12xf32, #tpu.memory_space<smem>>) -> (i32, i32, i32, i32) {
    %c0_i32 = arith.constant 0 : i32
    return %arg0, %arg3, %arg1, %arg2 : i32, i32, i32, i32
  }
  func.func @transform_2(%arg0: i32, %arg1: i32, %arg2: i32, %arg3: i32, %arg4: memref<12xf32, #tpu.memory_space<smem>>) -> (i32, i32, i32) {
    %c0_i32 = arith.constant 0 : i32
    return %arg0, %arg1, %arg2 : i32, i32, i32
  }
}

</mosaic_0001>

<llo_original>
// kernel: tpu_custom_call.1
$region0: #{tpu_custom_call.1}
  #allocation0 [shape = 'u32[]', space=smem, size = 0x4, offset = 0x4, fixed_abs, tag = 'smem constant byte address 0x4 - core index']
  #allocation1 [shape = 'u32[144,128]{1,0:T(1,128)}', space=vmem, size = 0x12000, scoped, tag = 'internal scratch']
  #allocation2 [shape = 'f32[16,128]{1,0:T(8,128)}', space=vmem, size = 0x2000, scoped, tag = 'scratch operand']
  #allocation3 [shape = 's32[1]{0}', space=sflag, size = 0x4, scoped, tag = 'scoped memory for tpu_custom_call.1']
  #allocation4 [shape = 'u8[512]{0}', space=smem, size = 0x200, scoped, tag = 'prefetched SMEM operand 0']
  %s0 = inlined_call_operand.hbm [shape: f32[12], index: 0, kind: input, shape index: {}]
  %s1 = inlined_call_operand.hbm [shape: f32[3,16,128], index: 1, kind: input, shape index: {}]
  %s2 = inlined_call_operand.hbm [shape: f32[3,4,16,128], index: 2, kind: input, shape index: {}]
  %s3 = inlined_call_operand.hbm [shape: f32[3,16,128], index: 3, kind: output, shape index: {}]
  %s4 = sld [smem:[#allocation0]]
  $region57: #{tpu_custom_call.1} parent=0
    _
  %s6 = ssub.s32 1, %s4
  %s7 = scalar_select 0, %s6, %s4
  %9 = dma.hbm_to_smem %s0, 16, [#allocation4], [#allocation3]
  %10 = dma.done [#allocation3], 16
  %11 = sfence
  $region1: #{tpu_custom_call.1} parent=0
    #allocation5 [shape = 'u8[16384]{0}', space=vmem, size = 0x4000, scoped, tag = 'input window, operand 1']
    #allocation6 [shape = 's32[2]{0}', space=sflag, size = 0x8, scoped, tag = 'scoped memory for tpu_custom_call.1']
    #allocation7 [shape = 's32[2]{0}', space=sflag, size = 0x8, scoped, tag = 'scoped memory for tpu_custom_call.1']
    #allocation8 [shape = 'u8[16384]{0}', space=vmem, size = 0x4000, scoped, tag = 'input window, operand 2']
    #allocation9 [shape = 's32[2]{0}', space=sflag, size = 0x8, scoped, tag = 'scoped memory for tpu_custom_call.1']
    #allocation10 [shape = 'u8[16384]{0}', space=vmem, size = 0x4000, scoped, tag = 'output window, operand 0']
    %12 = vsyncpa [#allocation6], 0
    %s13 = scalar_lea.sflag [#allocation6], 1
    %14 = vsyncpa %s13, 0
    %15 = vsyncpa [#allocation9], 0
    %s16 = scalar_lea.sflag [#allocation9], 1
    %17 = vsyncpa %s16, 0
    %18 = vsyncpa [#allocation7], 0
    %s19 = scalar_lea.sflag [#allocation7], 1
    %20 = vsyncpa %s19, 0
    loop: start=0, step=1, limit=14
    $region2: #{tpu_custom_call.1} parent=1 // loop_pre_header
      _
    $region3: #{tpu_custom_call.1} parent=1 // loop_header
      %s22 = sphi 0, %s26
      %p23 = scmp.ge.s32.totalorder %s22, 14
      %s29 = sphi 0, %s55
      %s30 = sphi 0, %s51
      %s31 = sphi 0, %s47
      %s32 = sphi 0, %s43
      %s33 = sphi 0, %s29
      %s34 = sphi 0, %s30
      %s35 = sphi 0, %s31
      %s36 = sphi 0, %s32
      %s37 = sphi 0, %s33
      %s38 = sphi 0, %s34
      %s39 = sphi 0, %s35
      %s40 = sphi 0, %s36
      %s62 = sphi 0, %s64
      %s65 = sphi 0, %s62
      %s66 = sphi 0, %s65
      %s82 = sphi 0, %s66
      %s94 = sphi 0, %s96
      %s97 = sphi 0, %s94
      %s98 = sphi 0, %s97
      %s114 = sphi 0, %s98
      %s124 = sphi 0, %s126
      %s127 = sphi 0, %s124
      %s128 = sphi 0, %s127
      %s144 = sphi 0, %s128
    $region4: #{tpu_custom_call.1} parent=1 // loop_header_branch
      %25 = sbr.rel (%p23) target = $region8
    $region5: #{tpu_custom_call.1} parent=1 // loop_body
      %s27 = ssub.s32 %s22, 1
      %s28 = ssub.s32 %s22, 2
      %s41 = sadd.s32 1, %s32
      %p42 = scmp.ge.s32.totalorder %s41, 4
      %s43 = scalar_select %p42, 0, %s41
      %s44 = sadd.s32 1, %s31
      %s45 = scalar_select %p42, %s44, %s31
      %p46 = scmp.ge.s32.totalorder %s45, 1
      %s47 = scalar_select %p46, 0, %s45
      %s48 = sadd.s32 1, %s30
      %s49 = scalar_select %p46, %s48, %s30
      %p50 = scmp.ge.s32.totalorder %s49, 1
      %s51 = scalar_select %p50, 0, %s49
      %s52 = sadd.s32 1, %s29
      %s53 = scalar_select %p50, %s52, %s29
      %p54 = scmp.ge.s32.totalorder %s53, 3
      %s55 = scalar_select %p54, 0, %s53
      %s56 = ssub.s32 %s29, %s55
      %s57 = ssub.s32 %s30, %s51
      %s58 = sor.u32 %s56, %s57
      %s59 = ssub.s32 %s31, %s47
      %s60 = sor.u32 %s58, %s59
      %p61 = scmp.eq.s32.totalorder %s60, 0
      %s63 = sadd.s32 %s62, 1
      %s64 = scalar_select %p61, %s62, %s63
      %p67 = pneg %p61
      %p68 = scmp.eq.s32.totalorder %s22, 11
      %p69 = por %p67, %p68
      %p70 = scmp.ne.s32.totalorder %s62, %s65
      %p71 = scmp.eq.s32.totalorder %s22, 0
      %p72 = por %p70, %p71
      %p73 = scmp.ne.s32.totalorder %s62, %s65
      %p74 = scmp.eq.s32.totalorder %s27, 11
      %p75 = por %p73, %p74
      %p76 = scmp.ne.s32.totalorder %s65, %s66
      %p77 = scmp.eq.s32.totalorder %s27, 0
      %p78 = por %p76, %p77
      %p79 = scmp.ne.s32.totalorder %s65, %s66
      %p80 = scmp.eq.s32.totalorder %s28, 11
      %p81 = por %p79, %p80
      %p83 = scmp.ne.s32.totalorder %s66, %s82
      %p84 = scmp.eq.s32.totalorder %s28, 0
      %p85 = por %p83, %p84
      %s86 = ssub.s32 %s29, %s55
      %s87 = ssub.s32 %s32, %s43
      %s88 = sor.u32 %s86, %s87
      %s89 = ssub.s32 %s30, %s51
      %s90 = sor.u32 %s88, %s89
      %s91 = ssub.s32 %s31, %s47
      %s92 = sor.u32 %s90, %s91
      %p93 = scmp.eq.s32.totalorder %s92, 0
      %s95 = sadd.s32 %s94, 1
      %s96 = scalar_select %p93, %s94, %s95
      %p99 = pneg %p93
      %p100 = scmp.eq.s32.totalorder %s22, 11
      %p101 = por %p99, %p100
      %p102 = scmp.ne.s32.totalorder %s94, %s97
      %p103 = scmp.eq.s32.totalorder %s22, 0
      %p104 = por %p102, %p103
      %p105 = scmp.ne.s32.totalorder %s94, %s97
      %p106 = scmp.eq.s32.totalorder %s27, 11
      %p107 = por %p105, %p106
      %p108 = scmp.ne.s32.totalorder %s97, %s98
      %p109 = scmp.eq.s32.totalorder %s27, 0
      %p110 = por %p108, %p109
      %p111 = scmp.ne.s32.totalorder %s97, %s98
      %p112 = scmp.eq.s32.totalorder %s28, 11
      %p113 = por %p111, %p112
      %p115 = scmp.ne.s32.totalorder %s98, %s114
      %p116 = scmp.eq.s32.totalorder %s28, 0
      %p117 = por %p115, %p116
      %s118 = ssub.s32 %s29, %s55
      %s119 = ssub.s32 %s30, %s51
      %s120 = sor.u32 %s118, %s119
      %s121 = ssub.s32 %s31, %s47
      %s122 = sor.u32 %s120, %s121
      %p123 = scmp.eq.s32.totalorder %s122, 0
      %s125 = sadd.s32 %s124, 1
      %s126 = scalar_select %p123, %s124, %s125
      %p129 = pneg %p123
      %p130 = scmp.eq.s32.totalorder %s22, 11
      %p131 = por %p129, %p130
      %p132 = scmp.ne.s32.totalorder %s124, %s127
      %p133 = scmp.eq.s32.totalorder %s22, 0
      %p134 = por %p132, %p133
      %p135 = scmp.ne.s32.totalorder %s124, %s127
      %p136 = scmp.eq.s32.totalorder %s27, 11
      %p137 = por %p135, %p136
      %p138 = scmp.ne.s32.totalorder %s127, %s128
      %p139 = scmp.eq.s32.totalorder %s27, 0
      %p140 = por %p138, %p139
      %p141 = scmp.ne.s32.totalorder %s127, %s128
      %p142 = scmp.eq.s32.totalorder %s28, 11
      %p143 = por %p141, %p142
      %p145 = scmp.ne.s32.totalorder %s128, %s144
      %p146 = scmp.eq.s32.totalorder %s28, 0
      %p147 = por %p145, %p146
      %p148 = scmp.le.s32.totalorder 1, %s22
      %p149 = scmp.lt.s32.totalorder %s22, 13
      %p150 = pnand %p148, %p149
      %p151 = pneg %p150
      // Predicated region
      $region9: #{tpu_custom_call.1} parent=5 // pred_check
        _
      $region10: #{tpu_custom_call.1} parent=5 // pred_check_branch
        %153 = sbr.rel (%p150) target = $region12
      $region11: #{tpu_custom_call.1} parent=5 // pred_region
        %s154 = ssub.s32 %s22, 1
      $region12: #{tpu_custom_call.1} parent=5 // pred_fallthru
        _
      %p155 = scmp.lt.s32.totalorder %s22, 12
      // Predicated region
      $region13: #{tpu_custom_call.1} parent=5 // pred_check
        %p156 = pneg %p155
      $region14: #{tpu_custom_call.1} parent=5 // pred_check_branch
        %158 = sbr.rel (%p156) target = $region16
      $region15: #{tpu_custom_call.1} parent=5 // pred_region
        // Predicated region
        $region17: #{tpu_custom_call.1} parent=15 // pred_check
          %p159 = pneg %p72
        $region18: #{tpu_custom_call.1} parent=15 // pred_check_branch
          %161 = sbr.rel (%p159) target = $region20
        $region19: #{tpu_custom_call.1} parent=15 // pred_region
          %s162 = sand.u32 %s62, 1
          %s163 = scalar_lea.sflag [#allocation6], %s162
          %s164 = sand.u32 %s62, 1
          %s165 = smul.addr %s164, 16
          %s166 = scalar_lea.vmem [#allocation5], %s165
          %s167 = smul.u32 2, %s30
          %s169 = ssub.s32 256, 256
          %170 = vsyncadd %s163, %s169
          %s171 = sadd.s32 %s31, %s167
          %s172 = smul.addr %s29, 2
          %s173 = sadd.s32 %s171, %s172
          %s174 = smul.addr %s173, 128
          %s175 = scalar_lea.hbm %s1, %s174
          %s176 = sshll.u32 %s166, 4
          %s177 = int_to_ptr.vmem [resolvable:$true] %s176
          %182 = dma.hbm_to_vmem [thread:$0]  %s175, 256, %s177, %s163, 128, 128, 8
        $region20: #{tpu_custom_call.1} parent=15 // pred_fallthru
          _
        // Predicated region
        $region21: #{tpu_custom_call.1} parent=15 // pred_check
          %p183 = pneg %p104
        $region22: #{tpu_custom_call.1} parent=15 // pred_check_branch
          %185 = sbr.rel (%p183) target = $region24
        $region23: #{tpu_custom_call.1} parent=15 // pred_region
          %s186 = sand.u32 %s94, 1
          %s187 = scalar_lea.sflag [#allocation9], %s186
          %s188 = sand.u32 %s94, 1
          %s189 = smul.addr %s188, 16
          %s190 = scalar_lea.vmem [#allocation8], %s189
          %s191 = smul.u32 2, %s30
          %s193 = ssub.s32 256, 256
          %194 = vsyncadd %s187, %s193
          %s195 = sadd.s32 %s31, %s191
          %s196 = smul.addr %s32, 2
          %s197 = sadd.s32 %s195, %s196
          %s198 = smul.addr %s29, 8
          %s199 = sadd.s32 %s197, %s198
          %s200 = smul.addr %s199, 128
          %s201 = scalar_lea.hbm %s2, %s200
          %s202 = sshll.u32 %s190, 4
          %s203 = int_to_ptr.vmem [resolvable:$true] %s202
          %208 = dma.hbm_to_vmem [thread:$0]  %s201, 256, %s203, %s187, 128, 128, 8
        $region24: #{tpu_custom_call.1} parent=15 // pred_fallthru
          _
      $region16: #{tpu_custom_call.1} parent=5 // pred_fallthru
        _
      %p209 = scmp.le.s32.totalorder 1, %s22
      %p210 = scmp.lt.s32.totalorder %s22, 13
      %p211 = pnand %p209, %p210
      %p212 = pneg %p211
      // Predicated region
      $region25: #{tpu_custom_call.1} parent=5 // pred_check
        _
      $region26: #{tpu_custom_call.1} parent=5 // pred_check_branch
        %214 = sbr.rel (%p211) target = $region28
      $region27: #{tpu_custom_call.1} parent=5 // pred_region
        %s215 = ssub.s32 %s22, 1
        %s216 = sand.u32 %s65, 1
        %s217 = scalar_lea.sflag [#allocation6], %s216
        %s218 = sand.u32 %s65, 1
        %s219 = smul.addr %s218, 16
        %s220 = scalar_lea.vmem [#allocation5], %s219
        // Predicated region
        $region29: #{tpu_custom_call.1} parent=27 // pred_check
          %p221 = pneg %p78
        $region30: #{tpu_custom_call.1} parent=27 // pred_check_branch
          %223 = sbr.rel (%p221) target = $region32
        $region31: #{tpu_custom_call.1} parent=27 // pred_region
          %224 = dma.done %s217, 256
        $region32: #{tpu_custom_call.1} parent=27 // pred_fallthru
          _
        %s225 = sand.u32 %s97, 1
        %s226 = scalar_lea.sflag [#allocation9], %s225
        %s227 = sand.u32 %s97, 1
        %s228 = smul.addr %s227, 16
        %s229 = scalar_lea.vmem [#allocation8], %s228
        // Predicated region
        $region33: #{tpu_custom_call.1} parent=27 // pred_check
          %p230 = pneg %p110
        $region34: #{tpu_custom_call.1} parent=27 // pred_check_branch
          %232 = sbr.rel (%p230) target = $region36
        $region35: #{tpu_custom_call.1} parent=27 // pred_region
          %233 = dma.done %s226, 256
        $region36: #{tpu_custom_call.1} parent=27 // pred_fallthru
          _
        %s234 = sand.u32 %s65, 1
        %s235 = scalar_lea.sflag [#allocation6], %s234
        %s236 = sand.u32 %s65, 1
        %s237 = smul.addr %s236, 16
        %s238 = scalar_lea.vmem [#allocation5], %s237
        %p239 = pneg %p78
        %p240 = pneg %p75
        %s241 = sand.u32 %s97, 1
        %s242 = scalar_lea.sflag [#allocation9], %s241
        %s243 = sand.u32 %s97, 1
        %s244 = smul.addr %s243, 16
        %s245 = scalar_lea.vmem [#allocation8], %s244
        %p246 = pneg %p110
        %p247 = pneg %p107
        %p248 = pneg %p140
        %p249 = pneg %p137
        %s250 = sand.u32 %s127, 1
        %s251 = scalar_lea.sflag [#allocation7], %s250
        %s252 = sand.u32 %s127, 1
        %s253 = smul.addr %s252, 16
        %s254 = scalar_lea.vmem [#allocation10], %s253
        %s255 = smul.u32 2, %s34
        %s256 = smul.u32 2, %s34
        %s257 = smul.u32 2, %s34
        %p258 = scmp.eq.s32.totalorder %s36, 0
        // Predicated region
        $region37: #{tpu_custom_call.1} parent=27 // pred_check
          %p259 = pneg %p258
        $region38: #{tpu_custom_call.1} parent=27 // pred_check_branch
          %261 = sbr.rel (%p259) target = $region40
        $region39: #{tpu_custom_call.1} parent=27 // pred_region
          %v262 = vld [vmem:[%s220] sm:$0xff]
          %v263 = vld [vmem:[%s220 + $0x8] sm:$0xff]
          %264 = vst [vmem:[#allocation2] sm:$0xff] %v262
          %265 = vst [vmem:[#allocation2 + $0x8] sm:$0xff] %v263
        $region40: #{tpu_custom_call.1} parent=27 // pred_fallthru
          _
        %s266 = smul.u32 %s33, 4
        %s267 = sadd.s32 %s266, %s36
        %s268 = sld [smem:[#allocation4 + %s267]]
        %v269 = vld [vmem:[#allocation2] sm:$0xff]
        %v270 = vld [vmem:[#allocation2 + $0x8] sm:$0xff]
        %v271 = vld [vmem:[%s229] sm:$0xff]
        %v272 = vld [vmem:[%s229 + $0x8] sm:$0xff]
        %v273 = vstv %s268
        %v274 = vmul.f32 %v273, %v271
        %v275 = vmul.f32 %v273, %v272
        %v276 = vadd.f32 %v269, %v274
        %v277 = vadd.f32 %v270, %v275
        %278 = vst [vmem:[#allocation2] sm:$0xff] %v276
        %279 = vst [vmem:[#allocation2 + $0x8] sm:$0xff] %v277
        %p280 = scmp.eq.s32.totalorder %s36, 3
        // Predicated region
        $region41: #{tpu_custom_call.1} parent=27 // pred_check
          %p281 = pneg %p280
        $region42: #{tpu_custom_call.1} parent=27 // pred_check_branch
          %283 = sbr.rel (%p281) target = $region44
        $region43: #{tpu_custom_call.1} parent=27 // pred_region
          %v284 = vld [vmem:[#allocation2] sm:$0xff]
          %v285 = vld [vmem:[#allocation2 + $0x8] sm:$0xff]
          %286 = vst [vmem:[%s254] sm:$0xff] %v284
          %287 = vst [vmem:[%s254 + $0x8] sm:$0xff] %v285
        $region44: #{tpu_custom_call.1} parent=27 // pred_fallthru
          _
        %s288 = sand.u32 %s127, 1
        %s289 = scalar_lea.sflag [#allocation7], %s288
        %s290 = sand.u32 %s127, 1
        %s291 = smul.addr %s290, 16
        %s292 = scalar_lea.vmem [#allocation10], %s291
        // Predicated region
        $region45: #{tpu_custom_call.1} parent=27 // pred_check
          %p293 = pneg %p137
        $region46: #{tpu_custom_call.1} parent=27 // pred_check_branch
          %295 = sbr.rel (%p293) target = $region48
        $region47: #{tpu_custom_call.1} parent=27 // pred_region
          %s296 = smul.u32 2, %s34
          %s298 = ssub.s32 256, 256
          %299 = vsyncadd %s289, %s298
          %s300 = sadd.s32 %s35, %s296
          %s301 = smul.addr %s33, 2
          %s302 = sadd.s32 %s300, %s301
          %s303 = smul.addr %s302, 128
          %s304 = scalar_lea.hbm %s3, %s303
          %s305 = sshll.u32 %s292, 4
          %s306 = int_to_ptr.vmem [resolvable:$true] %s305
          %311 = dma.vmem_to_hbm [thread:$0]  %s306, 256, %s304, %s289, 128, 128, 8
        $region48: #{tpu_custom_call.1} parent=27 // pred_fallthru
          _
      $region28: #{tpu_custom_call.1} parent=5 // pred_fallthru
        _
      %p312 = scmp.le.s32.totalorder 2, %s22
      // Predicated region
      $region49: #{tpu_custom_call.1} parent=5 // pred_check
        %p313 = pneg %p312
      $region50: #{tpu_custom_call.1} parent=5 // pred_check_branch
        %315 = sbr.rel (%p313) target = $region52
      $region51: #{tpu_custom_call.1} parent=5 // pred_region
        %s316 = ssub.s32 %s22, 2
        // Predicated region
        $region53: #{tpu_custom_call.1} parent=51 // pred_check
          %p317 = pneg %p143
        $region54: #{tpu_custom_call.1} parent=51 // pred_check_branch
          %319 = sbr.rel (%p317) target = $region56
        $region55: #{tpu_custom_call.1} parent=51 // pred_region
          %s320 = sand.u32 %s128, 1
          %s321 = scalar_lea.sflag [#allocation7], %s320
          %s322 = sand.u32 %s128, 1
          %s323 = smul.addr %s322, 16
          %s324 = scalar_lea.vmem [#allocation10], %s323
          %325 = dma.done %s321, 256
        $region56: #{tpu_custom_call.1} parent=51 // pred_fallthru
          _
      $region52: #{tpu_custom_call.1} parent=5 // pred_fallthru
        _
    $region6: #{tpu_custom_call.1} parent=1 // loop_footer
      %s26 = sadd.s32 1, %s22
    $region7: #{tpu_custom_call.1} parent=1 // loop_footer_branch
      %21 = sbr.rel target = $region3
    $region8: #{tpu_custom_call.1} parent=1 // loop_exit
      _
    %326 = vsyncpa [#allocation6], 1
    %s327 = scalar_lea.sflag [#allocation6], 1
    %328 = vsyncpa %s327, 1
    %329 = vsyncpa [#allocation9], 1
    %s330 = scalar_lea.sflag [#allocation9], 1
    %331 = vsyncpa %s330, 1
    %332 = vsyncpa [#allocation7], 1
    %s333 = scalar_lea.sflag [#allocation7], 1
    %334 = vsyncpa %s333, 1

</llo_original>
